<compile_context>
chip_gen: v7x
topology: tpu7x:2x2x1
jax: 0.10.0
libtpu: 0.0.40
codegen_flags: <defaults>
</compile_context>

<pallas_src>
import functools

import jax
import jax.numpy as jnp
from jax import lax
from jax.experimental import pallas as pl
from jax.experimental.pallas import tpu as pltpu


def _round_up(x, m):
    return ((x + m - 1) // m) * m


def _recurrence(xw_ref, whh_ref, out_ref, h_state, *, n_steps, batch, hp):
    """Serial tanh recurrence over one time-chunk.

    xw_ref:  (Tt*Bg, Hp) f32  pre-activation input projection (x@W_ih^T + b)
    whh_ref: (Hp, Hp)         W_hh^T (zero-padded on H)
    out_ref: (Tt*Bg, Hp)      flattened time-major output chunk
    h_state: (Bg, Hp) f32     recurrent state carried across time chunks
    """
    # h_0 = zeros at the first time-chunk of each batch group.
    @pl.when(pl.program_id(1) == 0)
    def _():
        h_state[...] = jnp.zeros_like(h_state)

    # Keep W_hh^T resident in vregs only when it fits comfortably
    # (Hp <= 128 f32 = 16 vregs); otherwise leave it as a ref operand.
    hoist = hp <= 128
    whh_v = whh_ref[...] if hoist else None

    def step(t, h_prev):
        row = pl.multiple_of(t * batch, batch)
        rhs = whh_v if hoist else whh_ref[...]
        pre = xw_ref[pl.ds(row, batch), :] + jnp.dot(
            h_prev, rhs, preferred_element_type=jnp.float32)
        h_new = jnp.tanh(pre)
        out_ref[pl.ds(row, batch), :] = h_new.astype(out_ref.dtype)
        return h_new

    # Bounded unroll: enough overlap between adjacent steps without spills.
    h_last = lax.fori_loop(0, n_steps, step, h_state[...],
                           unroll=min(8, max(1, n_steps)))
    h_state[...] = h_last


def rnn_kernel_preproj(xw_ref, whh_ref, out_ref, h_state,
                       *, n_steps, batch, hp):
    """Recurrence only; input projection precomputed in XLA (tiny I path)."""
    _recurrence(xw_ref, whh_ref, out_ref, h_state,
                n_steps=n_steps, batch=batch, hp=hp)


def rnn_kernel_fused(x_ref, wih_ref, whh_ref, bias_ref, out_ref,
                     h_state, xw_scratch, *, n_steps, batch, hp):
    """In-kernel hoisted input projection (large I path): one big MXU matmul
    per chunk, native-dtype operands, f32 accumulation."""
    xw_scratch[...] = (
        jnp.dot(x_ref[...], wih_ref[...], preferred_element_type=jnp.float32)
        + bias_ref[...])
    _recurrence(xw_scratch, whh_ref, out_ref, h_state,
                n_steps=n_steps, batch=batch, hp=hp)


def rnn_forward(x, w_ih, w_hh, b_ih, b_hh, *, time_chunk=None,
                num_batch_groups=None):
    """x: (B, T, I) batch-first (PyTorch layout). Returns out: (B, T, H)."""
    B, T, I = x.shape
    H = w_ih.shape[0]

    Bp = _round_up(B, 8)      # sublane-aligned batch
    Hp = _round_up(H, 128)    # lane-dense hidden dim

    # Batch groups: keep the MXU M dimension as one tile up to 256 rows;
    # split only beyond that (or on request, e.g. 2 groups to feed both v7x
    # TensorCores when B is large).
    if num_batch_groups is None:
        num_batch_groups = max(1, pl.cdiv(Bp, 256))
    G = int(num_batch_groups)
    Bg = _round_up(pl.cdiv(Bp, G), 8)
    Bp = Bg * G

    # Auto-size the time chunk: amortize per-grid-step overhead while keeping
    # the per-chunk VMEM working set a few MiB (safe on v7x 64 MiB VMEM).
    if time_chunk is None:
        bytes_per_step = Bg * Hp * (4 + 4 + 2 * x.dtype.itemsize)
        time_chunk = max(8, min(256, (8 << 20) // max(bytes_per_step, 1)))
    Tt = max(1, min(int(time_chunk), T))
    Tp = _round_up(T, Tt)
    num_chunks = Tp // Tt

    # Layout plumbing (done once by XLA): time-major, padded, grouped,
    # flattened so every kernel block is a dense (Tt*Bg, .) slab.
    x_tm = jnp.transpose(x, (1, 0, 2))                          # (T, B, I)
    x_tm = jnp.pad(x_tm, ((0, Tp - T), (0, Bp - B), (0, 0)))    # (Tp, Bp, I)
    x_g = x_tm.reshape(Tp, G, Bg, I).transpose(1, 0, 2, 3)      # (G, Tp, Bg, I)
    x2d = x_g.reshape(G * Tp * Bg, I)

    wih_t = jnp.pad(jnp.transpose(w_ih), ((0, 0), (0, Hp - H)))        # (I, Hp)
    whh_t = jnp.pad(jnp.transpose(w_hh), ((0, Hp - H), (0, Hp - H)))   # (Hp,Hp)
    bias = jnp.pad((b_ih + b_hh).reshape(1, H).astype(jnp.float32),
                   ((0, 0), (0, Hp - H)))                              # (1, Hp)

    rows = Tt * Bg
    out_dtype = x.dtype

    def chunk_map(g, c):
        return (g * num_chunks + c, 0)

    whh_spec = pl.BlockSpec((Hp, Hp), lambda g, c: (0, 0))
    out_spec = pl.BlockSpec((rows, Hp), chunk_map)

    precompute_proj = I < 128   # tiny K: do the projection once in XLA

    if precompute_proj:
        # Hoist x @ W_ih^T + (b_ih + b_hh) out of the kernel entirely.
        xw = jnp.dot(x2d.astype(jnp.float32), wih_t.astype(jnp.float32),
                     preferred_element_type=jnp.float32) + bias
        kernel = functools.partial(rnn_kernel_preproj,
                                   n_steps=Tt, batch=Bg, hp=Hp)
        in_specs = [pl.BlockSpec((rows, Hp), chunk_map), whh_spec]
        operands = (xw, whh_t)
        scratch = [pltpu.VMEM((Bg, Hp), jnp.float32)]
        vmem_est = (2 * rows * Hp * 4
                    + 2 * rows * Hp * out_dtype.itemsize
                    + 2 * Hp * Hp * whh_t.dtype.itemsize
                    + Bg * Hp * 4)
    else:
        kernel = functools.partial(rnn_kernel_fused,
                                   n_steps=Tt, batch=Bg, hp=Hp)
        in_specs = [
            pl.BlockSpec((rows, I), chunk_map),
            pl.BlockSpec((I, Hp), lambda g, c: (0, 0)),
            whh_spec,
            pl.BlockSpec((1, Hp), lambda g, c: (0, 0)),
        ]
        operands = (x2d, wih_t, whh_t, bias)
        scratch = [pltpu.VMEM((Bg, Hp), jnp.float32),
                   pltpu.VMEM((rows, Hp), jnp.float32)]
        vmem_est = (2 * rows * I * x.dtype.itemsize
                    + 2 * rows * Hp * out_dtype.itemsize
                    + rows * Hp * 4
                    + 2 * I * Hp * wih_t.dtype.itemsize
                    + 2 * Hp * Hp * whh_t.dtype.itemsize
                    + Bg * Hp * 4)

    vmem_limit = int(min(56 << 20, max(16 << 20, 2 * vmem_est)))

    out2d = pl.pallas_call(
        kernel,
        out_shape=jax.ShapeDtypeStruct((G * Tp * Bg, Hp), out_dtype),
        grid=(G, num_chunks),
        in_specs=in_specs,
        out_specs=out_spec,
        scratch_shapes=scratch,
        compiler_params=pltpu.CompilerParams(
            dimension_semantics=("parallel", "arbitrary"),
            vmem_limit_bytes=vmem_limit),
    )(*operands)

    out = out2d.reshape(G, Tp, Bg, Hp).transpose(1, 0, 2, 3)   # (Tp, G, Bg, Hp)
    out = out.reshape(Tp, Bp, Hp)[:T, :B, :H]                  # strip padding
    return jnp.transpose(out, (1, 0, 2))                       # (B, T, H)


def rnn_reference(x, w_ih, w_hh, b_ih, b_hh):
    """Pure-JAX reference matching torch.nn.RNN(batch_first=True), tanh."""
    B, T, I = x.shape
    H = w_ih.shape[0]
    h = jnp.zeros((B, H), jnp.float32)
    outs = []
    for t in range(T):
        h = jnp.tanh(x[:, t, :] @ w_ih.T + b_ih + h @ w_hh.T + b_hh)
        outs.append(h)
    return jnp.stack(outs, axis=1).astype(x.dtype)


if __name__ == "__main__":
    # Small shapes consistent with the module: batch=2, seq=8, input=16, hidden=32
    batch_size, seq_len, input_size, hidden_size = 2, 8, 16, 32

    key = jax.random.PRNGKey(0)
    kx, k1, k2, k3, k4 = jax.random.split(key, 5)

    # PyTorch RNN default init: U(-1/sqrt(H), 1/sqrt(H))
    bound = 1.0 / (hidden_size ** 0.5)
    w_ih = jax.random.uniform(k1, (hidden_size, input_size), jnp.float32, -bound, bound)
    w_hh = jax.random.uniform(k2, (hidden_size, hidden_size), jnp.float32, -bound, bound)
    b_ih = jax.random.uniform(k3, (hidden_size,), jnp.float32, -bound, bound)
    b_hh = jax.random.uniform(k4, (hidden_size,), jnp.float32, -bound, bound)

    x = jax.random.normal(kx, (batch_size, seq_len, input_size), jnp.float32)

    fwd = jax.jit(rnn_forward)
    out = fwd(x, w_ih, w_hh, b_ih, b_hh)
    out = jax.block_until_ready(out)

    ref = rnn_reference(x, w_ih, w_hh, b_ih, b_hh)
    assert out.shape == (batch_size, seq_len, hidden_size)
    assert jnp.allclose(out, ref, atol=1e-5, rtol=1e-5), "mismatch vs reference"

    print("KERNEL_OK")
</pallas_src>

<mosaic_0001>
module attributes {stable_mosaic.version = 11 : i64} {
  func.func @rnn_kernel_preproj(%arg0: i32, %arg1: i32, %arg2: memref<64x128xf32, #tpu.memory_space<vmem>>, %arg3: memref<128x128xf32, #tpu.memory_space<vmem>>, %arg4: memref<64x128xf32, #tpu.memory_space<vmem>>, %arg5: memref<8x128xf32, #tpu.memory_space<vmem>>) attributes {dimension_semantics = [#tpu.dimension_semantics<parallel>, #tpu.dimension_semantics<arbitrary>], iteration_bounds = array<i64: 1, 1>, scalar_prefetch = 0 : i64, scratch_operands = 1 : i64, tpu.core_type = #tpu.core_type<tc>, window_params = [{transform_indices = @transform_0, window_bounds = array<i64: 64, 128>}, {pipeline_mode = #tpu.pipeline_mode<synchronous>, transform_indices = @transform_1, window_bounds = array<i64: 128, 128>}, {transform_indices = @transform_2, window_bounds = array<i64: 64, 128>}]} {
    %c0_i32 = arith.constant 0 : i32
    %0 = arith.cmpi eq, %arg1, %c0_i32 : i32
    %1 = arith.extui %0 : i1 to i32
    %c0_i32_0 = arith.constant 0 : i32
    %2 = arith.cmpi ne, %1, %c0_i32_0 : i32
    scf.if %2 {
      %cst_38 = arith.constant 0.000000e+00 : f32
      %78 = vector.broadcast %cst_38 : f32 to vector<8x128xf32>
      %c0_39 = arith.constant 0 : index
      %c0_40 = arith.constant 0 : index
      %79 = vector.load %arg5[%c0_39, %c0_40] : memref<8x128xf32, #tpu.memory_space<vmem>>, vector<8x128xf32>
      tpu.vector_store %arg5[%c0_39, %c0_40], %78 {strides = array<i32>} : memref<8x128xf32, #tpu.memory_space<vmem>>, vector<8x128xf32>,
    } else {
    }
    %c0 = arith.constant 0 : index
    %c0_1 = arith.constant 0 : index
    %3 = vector.load %arg3[%c0, %c0_1] : memref<128x128xf32, #tpu.memory_space<vmem>>, vector<128x128xf32>
    %c0_2 = arith.constant 0 : index
    %c0_3 = arith.constant 0 : index
    %4 = vector.load %arg5[%c0_2, %c0_3] : memref<8x128xf32, #tpu.memory_space<vmem>>, vector<8x128xf32>
    %c0_i32_4 = arith.constant 0 : i32
    %c8_i32 = arith.constant 8 : i32
    %5 = arith.muli %c0_i32_4, %c8_i32 : i32
    %6 = tpu.assume_multiple %5, 8 : i32
    %7 = arith.index_cast %6 : i32 to index
    %c0_5 = arith.constant 0 : index
    %8 = vector.load %arg2[%7, %c0_5] : memref<64x128xf32, #tpu.memory_space<vmem>>, vector<8x128xf32>
    %cst = arith.constant dense<0.000000e+00> : vector<8x128xf32>
    %9 = tpu.matmul %4, %3, %cst {dimension_numbers = #tpu.dot_dimension_numbers<[1], [0], [0], [1], [0, 0, 1, 1], [], []>} : vector<8x128xf32>, vector<128x128xf32>, vector<8x128xf32> -> vector<8x128xf32>
    %10 = arith.addf %8, %9 : vector<8x128xf32>
    %11 = math.tanh %10 : vector<8x128xf32>
    %12 = arith.index_cast %6 : i32 to index
    %c0_6 = arith.constant 0 : index
    %13 = vector.load %arg4[%12, %c0_6] : memref<64x128xf32, #tpu.memory_space<vmem>>, vector<8x128xf32>
    tpu.vector_store %arg4[%12, %c0_6], %11 {strides = array<i32>} : memref<64x128xf32, #tpu.memory_space<vmem>>, vector<8x128xf32>,
    %c1_i32 = arith.constant 1 : i32
    %c8_i32_7 = arith.constant 8 : i32
    %14 = arith.muli %c1_i32, %c8_i32_7 : i32
    %15 = tpu.assume_multiple %14, 8 : i32
    %16 = arith.index_cast %15 : i32 to index
    %c0_8 = arith.constant 0 : index
    %17 = vector.load %arg2[%16, %c0_8] : memref<64x128xf32, #tpu.memory_space<vmem>>, vector<8x128xf32>
    %cst_9 = arith.constant dense<0.000000e+00> : vector<8x128xf32>
    %18 = tpu.matmul %11, %3, %cst_9 {dimension_numbers = #tpu.dot_dimension_numbers<[1], [0], [0], [1], [0, 0, 1, 1], [], []>} : vector<8x128xf32>, vector<128x128xf32>, vector<8x128xf32> -> vector<8x128xf32>
    %19 = arith.addf %17, %18 : vector<8x128xf32>
    %20 = math.tanh %19 : vector<8x128xf32>
    %21 = arith.index_cast %15 : i32 to index
    %c0_10 = arith.constant 0 : index
    %22 = vector.load %arg4[%21, %c0_10] : memref<64x128xf32, #tpu.memory_space<vmem>>, vector<8x128xf32>
    tpu.vector_store %arg4[%21, %c0_10], %20 {strides = array<i32>} : memref<64x128xf32, #tpu.memory_space<vmem>>, vector<8x128xf32>,
    %c2_i32 = arith.constant 2 : i32
    %c8_i32_11 = arith.constant 8 : i32
    %23 = arith.muli %c2_i32, %c8_i32_11 : i32
    %24 = tpu.assume_multiple %23, 8 : i32
    %25 = arith.index_cast %24 : i32 to index
    %c0_12 = arith.constant 0 : index
    %26 = vector.load %arg2[%25, %c0_12] : memref<64x128xf32, #tpu.memory_space<vmem>>, vector<8x128xf32>
    %cst_13 = arith.constant dense<0.000000e+00> : vector<8x128xf32>
    %27 = tpu.matmul %20, %3, %cst_13 {dimension_numbers = #tpu.dot_dimension_numbers<[1], [0], [0], [1], [0, 0, 1, 1], [], []>} : vector<8x128xf32>, vector<128x128xf32>, vector<8x128xf32> -> vector<8x128xf32>
    %28 = arith.addf %26, %27 : vector<8x128xf32>
    %29 = math.tanh %28 : vector<8x128xf32>
    %30 = arith.index_cast %24 : i32 to index
    %c0_14 = arith.constant 0 : index
    %31 = vector.load %arg4[%30, %c0_14] : memref<64x128xf32, #tpu.memory_space<vmem>>, vector<8x128xf32>
    tpu.vector_store %arg4[%30, %c0_14], %29 {strides = array<i32>} : memref<64x128xf32, #tpu.memory_space<vmem>>, vector<8x128xf32>,
    %c3_i32 = arith.constant 3 : i32
    %c8_i32_15 = arith.constant 8 : i32
    %32 = arith.muli %c3_i32, %c8_i32_15 : i32
    %33 = tpu.assume_multiple %32, 8 : i32
    %34 = arith.index_cast %33 : i32 to index
    %c0_16 = arith.constant 0 : index
    %35 = vector.load %arg2[%34, %c0_16] : memref<64x128xf32, #tpu.memory_space<vmem>>, vector<8x128xf32>
    %cst_17 = arith.constant dense<0.000000e+00> : vector<8x128xf32>
    %36 = tpu.matmul %29, %3, %cst_17 {dimension_numbers = #tpu.dot_dimension_numbers<[1], [0], [0], [1], [0, 0, 1, 1], [], []>} : vector<8x128xf32>, vector<128x128xf32>, vector<8x128xf32> -> vector<8x128xf32>
    %37 = arith.addf %35, %36 : vector<8x128xf32>
    %38 = math.tanh %37 : vector<8x128xf32>
    %39 = arith.index_cast %33 : i32 to index
    %c0_18 = arith.constant 0 : index
    %40 = vector.load %arg4[%39, %c0_18] : memref<64x128xf32, #tpu.memory_space<vmem>>, vector<8x128xf32>
    tpu.vector_store %arg4[%39, %c0_18], %38 {strides = array<i32>} : memref<64x128xf32, #tpu.memory_space<vmem>>, vector<8x128xf32>,
    %c4_i32 = arith.constant 4 : i32
    %c8_i32_19 = arith.constant 8 : i32
    %41 = arith.muli %c4_i32, %c8_i32_19 : i32
    %42 = tpu.assume_multiple %41, 8 : i32
    %43 = arith.index_cast %42 : i32 to index
    %c0_20 = arith.constant 0 : index
    %44 = vector.load %arg2[%43, %c0_20] : memref<64x128xf32, #tpu.memory_space<vmem>>, vector<8x128xf32>
    %cst_21 = arith.constant dense<0.000000e+00> : vector<8x128xf32>
    %45 = tpu.matmul %38, %3, %cst_21 {dimension_numbers = #tpu.dot_dimension_numbers<[1], [0], [0], [1], [0, 0, 1, 1], [], []>} : vector<8x128xf32>, vector<128x128xf32>, vector<8x128xf32> -> vector<8x128xf32>
    %46 = arith.addf %44, %45 : vector<8x128xf32>
    %47 = math.tanh %46 : vector<8x128xf32>
    %48 = arith.index_cast %42 : i32 to index
    %c0_22 = arith.constant 0 : index
    %49 = vector.load %arg4[%48, %c0_22] : memref<64x128xf32, #tpu.memory_space<vmem>>, vector<8x128xf32>
    tpu.vector_store %arg4[%48, %c0_22], %47 {strides = array<i32>} : memref<64x128xf32, #tpu.memory_space<vmem>>, vector<8x128xf32>,
    %c5_i32 = arith.constant 5 : i32
    %c8_i32_23 = arith.constant 8 : i32
    %50 = arith.muli %c5_i32, %c8_i32_23 : i32
    %51 = tpu.assume_multiple %50, 8 : i32
    %52 = arith.index_cast %51 : i32 to index
    %c0_24 = arith.constant 0 : index
    %53 = vector.load %arg2[%52, %c0_24] : memref<64x128xf32, #tpu.memory_space<vmem>>, vector<8x128xf32>
    %cst_25 = arith.constant dense<0.000000e+00> : vector<8x128xf32>
    %54 = tpu.matmul %47, %3, %cst_25 {dimension_numbers = #tpu.dot_dimension_numbers<[1], [0], [0], [1], [0, 0, 1, 1], [], []>} : vector<8x128xf32>, vector<128x128xf32>, vector<8x128xf32> -> vector<8x128xf32>
    %55 = arith.addf %53, %54 : vector<8x128xf32>
    %56 = math.tanh %55 : vector<8x128xf32>
    %57 = arith.index_cast %51 : i32 to index
    %c0_26 = arith.constant 0 : index
    %58 = vector.load %arg4[%57, %c0_26] : memref<64x128xf32, #tpu.memory_space<vmem>>, vector<8x128xf32>
    tpu.vector_store %arg4[%57, %c0_26], %56 {strides = array<i32>} : memref<64x128xf32, #tpu.memory_space<vmem>>, vector<8x128xf32>,
    %c6_i32 = arith.constant 6 : i32
    %c8_i32_27 = arith.constant 8 : i32
    %59 = arith.muli %c6_i32, %c8_i32_27 : i32
    %60 = tpu.assume_multiple %59, 8 : i32
    %61 = arith.index_cast %60 : i32 to index
    %c0_28 = arith.constant 0 : index
    %62 = vector.load %arg2[%61, %c0_28] : memref<64x128xf32, #tpu.memory_space<vmem>>, vector<8x128xf32>
    %cst_29 = arith.constant dense<0.000000e+00> : vector<8x128xf32>
    %63 = tpu.matmul %56, %3, %cst_29 {dimension_numbers = #tpu.dot_dimension_numbers<[1], [0], [0], [1], [0, 0, 1, 1], [], []>} : vector<8x128xf32>, vector<128x128xf32>, vector<8x128xf32> -> vector<8x128xf32>
    %64 = arith.addf %62, %63 : vector<8x128xf32>
    %65 = math.tanh %64 : vector<8x128xf32>
    %66 = arith.index_cast %60 : i32 to index
    %c0_30 = arith.constant 0 : index
    %67 = vector.load %arg4[%66, %c0_30] : memref<64x128xf32, #tpu.memory_space<vmem>>, vector<8x128xf32>
    tpu.vector_store %arg4[%66, %c0_30], %65 {strides = array<i32>} : memref<64x128xf32, #tpu.memory_space<vmem>>, vector<8x128xf32>,
    %c7_i32 = arith.constant 7 : i32
    %c8_i32_31 = arith.constant 8 : i32
    %68 = arith.muli %c7_i32, %c8_i32_31 : i32
    %69 = tpu.assume_multiple %68, 8 : i32
    %70 = arith.index_cast %69 : i32 to index
    %c0_32 = arith.constant 0 : index
    %71 = vector.load %arg2[%70, %c0_32] : memref<64x128xf32, #tpu.memory_space<vmem>>, vector<8x128xf32>
    %cst_33 = arith.constant dense<0.000000e+00> : vector<8x128xf32>
    %72 = tpu.matmul %65, %3, %cst_33 {dimension_numbers = #tpu.dot_dimension_numbers<[1], [0], [0], [1], [0, 0, 1, 1], [], []>} : vector<8x128xf32>, vector<128x128xf32>, vector<8x128xf32> -> vector<8x128xf32>
    %73 = arith.addf %71, %72 : vector<8x128xf32>
    %74 = math.tanh %73 : vector<8x128xf32>
    %75 = arith.index_cast %69 : i32 to index
    %c0_34 = arith.constant 0 : index
    %76 = vector.load %arg4[%75, %c0_34] : memref<64x128xf32, #tpu.memory_space<vmem>>, vector<8x128xf32>
    tpu.vector_store %arg4[%75, %c0_34], %74 {strides = array<i32>} : memref<64x128xf32, #tpu.memory_space<vmem>>, vector<8x128xf32>,
    %c8_i32_35 = arith.constant 8 : i32
    %c0_36 = arith.constant 0 : index
    %c0_37 = arith.constant 0 : index
    %77 = vector.load %arg5[%c0_36, %c0_37] : memref<8x128xf32, #tpu.memory_space<vmem>>, vector<8x128xf32>
    tpu.vector_store %arg5[%c0_36, %c0_37], %74 {strides = array<i32>} : memref<8x128xf32, #tpu.memory_space<vmem>>, vector<8x128xf32>,
    return
  }
  func.func @transform_0(%arg0: i32, %arg1: i32) -> (i32, i32) {
    %c1_i32 = arith.constant 1 : i32
    %0 = arith.muli %arg0, %c1_i32 : i32
    %1 = arith.addi %0, %arg1 : i32
    %c0_i32 = arith.constant 0 : i32
    %c0_i32_0 = arith.constant 0 : i32
    return %1, %c0_i32 : i32, i32
  }
  func.func @transform_1(%arg0: i32, %arg1: i32) -> (i32, i32) {
    %c0_i32 = arith.constant 0 : i32
    %c0_i32_0 = arith.constant 0 : i32
    %c0_i32_1 = arith.constant 0 : i32
    return %c0_i32, %c0_i32_0 : i32, i32
  }
  func.func @transform_2(%arg0: i32, %arg1: i32) -> (i32, i32) {
    %c1_i32 = arith.constant 1 : i32
    %0 = arith.muli %arg0, %c1_i32 : i32
    %1 = arith.addi %0, %arg1 : i32
    %c0_i32 = arith.constant 0 : i32
    %c0_i32_0 = arith.constant 0 : i32
    return %1, %c0_i32 : i32, i32
  }
}

</mosaic_0001>

<llo_original>
// kernel: rnn_forward.1
$region0: #{rnn_forward.1}
  #allocation0 [shape = 'u32[]', space=smem, size = 0x4, offset = 0x4, fixed_abs, tag = 'smem constant byte address 0x4 - core index']
  #allocation1 [shape = 'u32[144,128]{1,0:T(1,128)}', space=vmem, size = 0x12000, scoped, tag = 'internal scratch']
  #allocation2 [shape = 'f32[8,128]{1,0:T(8,128)}', space=vmem, size = 0x1000, scoped, tag = 'scratch operand']
  %s0 = inlined_call_operand.vmem [shape: f32[64,128], index: 0, kind: input, shape index: {}]
  %s1 = inlined_call_operand.vmem [shape: f32[128,128], index: 1, kind: input, shape index: {}]
  %s2 = inlined_call_operand.vmem [shape: f32[64,128], index: 2, kind: output, shape index: {}]
  %s3 = sld [smem:[#allocation0]]
  $region22: #{rnn_forward.1} parent=0
    _
  %s5 = ssub.s32 1, %s3
  %s6 = scalar_select 0, %s5, %s3
  // Predicated region
  $region2: #{rnn_forward.1} parent=0 // pred_check
    _
  $region3: #{rnn_forward.1} parent=0 // pred_check_branch
    %8 = sbr.rel (0) target = $region5
  $region4: #{rnn_forward.1} parent=0 // pred_region
    %s9 = sadd.s32 0, 0
    %s10 = smul.u32 8, %s9
    %p11 = scmp.lt.s32.totalorder %s10, 7
    %s12 = scalar_select %p11, %s10, 7
    %s13 = smul.addr %s12, 8
    %s14 = scalar_lea.vmem %s0, %s13
    %s15 = sadd.s32 0, 0
    %s16 = smul.u32 8, %s15
  $region5: #{rnn_forward.1} parent=0 // pred_fallthru
    _
  // Predicated region
  $region6: #{rnn_forward.1} parent=0 // pred_check
    _
  $region7: #{rnn_forward.1} parent=0 // pred_check_branch
    %18 = sbr.rel (0) target = $region9
  $region8: #{rnn_forward.1} parent=0 // pred_region
    _
  $region9: #{rnn_forward.1} parent=0 // pred_fallthru
    _
  %s19 = sadd.s32 0, 0
  %s20 = smul.u32 8, %s19
  %p21 = scmp.lt.s32.totalorder %s20, 7
  %s22 = scalar_select %p21, %s20, 7
  %s23 = smul.addr %s22, 8
  %s24 = scalar_lea.vmem %s0, %s23
  %s25 = sadd.s32 0, 0
  %s26 = smul.u32 8, %s25
  %p27 = scmp.lt.s32.totalorder %s26, 7
  %s28 = scalar_select %p27, %s26, 7
  %s29 = smul.addr %s28, 8
  %s30 = scalar_lea.vmem %s2, %s29
  %s31 = sadd.s32 0, 0
  %s32 = smul.u32 8, %s31
  %p33 = scmp.lt.s32.totalorder %s32, 7
  %s34 = scalar_select %p33, %s32, 7
  %s35 = smul.addr %s34, 8
  %s36 = scalar_lea.vmem %s0, %s35
  %s37 = sadd.s32 0, 0
  %s38 = smul.u32 8, %s37
  %s39 = sadd.s32 0, 0
  %s40 = smul.u32 8, %s39
  %p41 = scmp.lt.s32.totalorder %s40, 7
  %s42 = scalar_select %p41, %s40, 7
  %s43 = smul.addr %s42, 8
  %s44 = scalar_lea.vmem %s2, %s43
  %s45 = sadd.s32 0, 0
  %s46 = smul.u32 8, %s45
  %p47 = scmp.eq.s32.totalorder 0, 0
  // Predicated region
  $region10: #{rnn_forward.1} parent=0 // pred_check
    %p48 = pneg %p47
  $region11: #{rnn_forward.1} parent=0 // pred_check_branch
    %50 = sbr.rel (%p48) target = $region13
  $region12: #{rnn_forward.1} parent=0 // pred_region
    %51 = vst [vmem:[#allocation2] sm:$0xff] 0.0
  $region13: #{rnn_forward.1} parent=0 // pred_fallthru
    _
  %v52 = vld [vmem:[%s1] sm:$0xff]
  %v53 = vld [vmem:[%s1 + $0x8] sm:$0xff]
  %v54 = vld [vmem:[%s1 + $0x10] sm:$0xff]
  %v55 = vld [vmem:[%s1 + $0x18] sm:$0xff]
  %v56 = vld [vmem:[%s1 + $0x20] sm:$0xff]
  %v57 = vld [vmem:[%s1 + $0x28] sm:$0xff]
  %v58 = vld [vmem:[%s1 + $0x30] sm:$0xff]
  %v59 = vld [vmem:[%s1 + $0x38] sm:$0xff]
  %v60 = vld [vmem:[%s1 + $0x40] sm:$0xff]
  %v61 = vld [vmem:[%s1 + $0x48] sm:$0xff]
  %v62 = vld [vmem:[%s1 + $0x50] sm:$0xff]
  %v63 = vld [vmem:[%s1 + $0x58] sm:$0xff]
  %v64 = vld [vmem:[%s1 + $0x60] sm:$0xff]
  %v65 = vld [vmem:[%s1 + $0x68] sm:$0xff]
  %v66 = vld [vmem:[%s1 + $0x70] sm:$0xff]
  %v67 = vld [vmem:[%s1 + $0x78] sm:$0xff]
  %v68 = vld [vmem:[#allocation2] sm:$0xff]
  %v69 = vld [vmem:[%s36] sm:$0xff]
  %70 = vmatprep.subr.mxu0 0.0
  %71 = vmatpush1.msra.mxu0 %v52
  %72 = vmatprep.subr.mxu0 0.0
  %73 = vmatpush1.msra.mxu0 %v53
  %74 = vmatprep.subr.mxu0 0.0
  %75 = vmatpush1.msra.mxu0 %v54
  %76 = vmatprep.subr.mxu0 0.0
  %77 = vmatpush1.msra.mxu0 %v55
  %78 = vmatprep.subr.mxu0 0.0
  %79 = vmatpush1.msra.mxu0 %v56
  %80 = vmatprep.subr.mxu0 0.0
  %81 = vmatpush1.msra.mxu0 %v57
  %82 = vmatprep.subr.mxu0 0.0
  %83 = vmatpush1.msra.mxu0 %v58
  %84 = vmatprep.subr.mxu0 0.0
  %85 = vmatpush1.msra.mxu0 %v59
  %86 = vmatprep.subr.mxu0 0.0
  %87 = vmatpush1.msra.mxu0 %v60
  %88 = vmatprep.subr.mxu0 0.0
  %89 = vmatpush1.msra.mxu0 %v61
  %90 = vmatprep.subr.mxu0 0.0
  %91 = vmatpush1.msra.mxu0 %v62
  %92 = vmatprep.subr.mxu0 0.0
  %93 = vmatpush1.msra.mxu0 %v63
  %94 = vmatprep.subr.mxu0 0.0
  %95 = vmatpush1.msra.mxu0 %v64
  %96 = vmatprep.subr.mxu0 0.0
  %97 = vmatpush1.msra.mxu0 %v65
  %98 = vmatprep.subr.mxu0 0.0
  %99 = vmatpush1.msra.mxu0 %v66
  %100 = vmatprep.subr.mxu0 0.0
  %101 = vmatpush1.msra.mxu0 %v67
  %102 = vmatprep.subr.mxu0 0.0
  %103 = vmatpush1.msra.mxu0 0.0
  %104 = vmatprep.subr.mxu0 0.0
  %105 = vmatpush1.msra.mxu0 0.0
  %106 = vmatprep.subr.mxu0 0.0
  %107 = vmatpush1.msra.mxu0 0.0
  %108 = vmatprep.subr.mxu0 0.0
  %109 = vmatpush1.msra.mxu0 0.0
  %110 = vmatprep.subr.mxu0 0.0
  %111 = vmatpush1.msra.mxu0 0.0
  %112 = vmatprep.subr.mxu0 0.0
  %113 = vmatpush1.msra.mxu0 0.0
  %114 = vmatprep.subr.mxu0 0.0
  %115 = vmatpush1.msra.mxu0 0.0
  %116 = vmatprep.subr.mxu0 0.0
  %117 = vmatpush1.msra.mxu0 0.0
  %118 = vmatprep.subr.mxu0 0.0
  %119 = vmatpush1.msra.mxu0 0.0
  %120 = vmatprep.subr.mxu0 0.0
  %121 = vmatpush1.msra.mxu0 0.0
  %122 = vmatprep.subr.mxu0 0.0
  %123 = vmatpush1.msra.mxu0 0.0
  %124 = vmatprep.subr.mxu0 0.0
  %125 = vmatpush1.msra.mxu0 0.0
  %126 = vmatprep.subr.mxu0 0.0
  %127 = vmatpush1.msra.mxu0 0.0
  %128 = vmatprep.subr.mxu0 0.0
  %129 = vmatpush1.msra.mxu0 0.0
  %130 = vmatprep.subr.mxu0 0.0
  %131 = vmatpush1.msra.mxu0 0.0
  %132 = vmatprep.subr.mxu0 0.0
  %133 = vmatpush1.msra.mxu0 0.0
  %134 = vmatprep.mubr.f32.mxu0 0.0
  %135 = vmatmul.mubr.f32.gmra.mrb[0].mxu0 %v68
  %v136 = vpop.f32.mrb[0].mxu0
  %v137 = vadd.f32 0.0, %v136
  %v138 = vpop.f32.mrb[0].mxu0
  %139 = vdwg.mxu0
  %v140 = vadd.f32 %v69, %v137
  %v141 = vtanh.pop %v140
  %142 = vst [vmem:[%s44] sm:$0xff] %v141
  %s143 = scalar_lea.vmem %s36, 8
  %v144 = vld [vmem:[%s143] sm:$0xff]
  %145 = vmatprep.subr.mxu0 0.0
  %146 = vmatpush1.msra.mxu0 %v52
  %147 = vmatprep.subr.mxu0 0.0
  %148 = vmatpush1.msra.mxu0 %v53
  %149 = vmatprep.subr.mxu0 0.0
  %150 = vmatpush1.msra.mxu0 %v54
  %151 = vmatprep.subr.mxu0 0.0
  %152 = vmatpush1.msra.mxu0 %v55
  %153 = vmatprep.subr.mxu0 0.0
  %154 = vmatpush1.msra.mxu0 %v56
  %155 = vmatprep.subr.mxu0 0.0
  %156 = vmatpush1.msra.mxu0 %v57
  %157 = vmatprep.subr.mxu0 0.0
  %158 = vmatpush1.msra.mxu0 %v58
  %159 = vmatprep.subr.mxu0 0.0
  %160 = vmatpush1.msra.mxu0 %v59
  %161 = vmatprep.subr.mxu0 0.0
  %162 = vmatpush1.msra.mxu0 %v60
  %163 = vmatprep.subr.mxu0 0.0
  %164 = vmatpush1.msra.mxu0 %v61
  %165 = vmatprep.subr.mxu0 0.0
  %166 = vmatpush1.msra.mxu0 %v62
  %167 = vmatprep.subr.mxu0 0.0
  %168 = vmatpush1.msra.mxu0 %v63
  %169 = vmatprep.subr.mxu0 0.0
  %170 = vmatpush1.msra.mxu0 %v64
  %171 = vmatprep.subr.mxu0 0.0
  %172 = vmatpush1.msra.mxu0 %v65
  %173 = vmatprep.subr.mxu0 0.0
  %174 = vmatpush1.msra.mxu0 %v66
  %175 = vmatprep.subr.mxu0 0.0
  %176 = vmatpush1.msra.mxu0 %v67
  %177 = vmatprep.subr.mxu0 0.0
  %178 = vmatpush1.msra.mxu0 0.0
  %179 = vmatprep.subr.mxu0 0.0
  %180 = vmatpush1.msra.mxu0 0.0
  %181 = vmatprep.subr.mxu0 0.0
  %182 = vmatpush1.msra.mxu0 0.0
  %183 = vmatprep.subr.mxu0 0.0
  %184 = vmatpush1.msra.mxu0 0.0
  %185 = vmatprep.subr.mxu0 0.0
  %186 = vmatpush1.msra.mxu0 0.0
  %187 = vmatprep.subr.mxu0 0.0
  %188 = vmatpush1.msra.mxu0 0.0
  %189 = vmatprep.subr.mxu0 0.0
  %190 = vmatpush1.msra.mxu0 0.0
  %191 = vmatprep.subr.mxu0 0.0
  %192 = vmatpush1.msra.mxu0 0.0
  %193 = vmatprep.subr.mxu0 0.0
  %194 = vmatpush1.msra.mxu0 0.0
  %195 = vmatprep.subr.mxu0 0.0
  %196 = vmatpush1.msra.mxu0 0.0
  %197 = vmatprep.subr.mxu0 0.0
  %198 = vmatpush1.msra.mxu0 0.0
  %199 = vmatprep.subr.mxu0 0.0
  %200 = vmatpush1.msra.mxu0 0.0
  %201 = vmatprep.subr.mxu0 0.0
  %202 = vmatpush1.msra.mxu0 0.0
  %203 = vmatprep.subr.mxu0 0.0
  %204 = vmatpush1.msra.mxu0 0.0
  %205 = vmatprep.subr.mxu0 0.0
  %206 = vmatpush1.msra.mxu0 0.0
  %207 = vmatprep.subr.mxu0 0.0
  %208 = vmatpush1.msra.mxu0 0.0
  %209 = vmatprep.mubr.f32.mxu0 0.0
  %210 = vmatmul.mubr.f32.gmra.mrb[0].mxu0 %v141
  %v211 = vpop.f32.mrb[0].mxu0
  %v212 = vadd.f32 0.0, %v211
  %v213 = vpop.f32.mrb[0].mxu0
  %214 = vdwg.mxu0
  %v215 = vadd.f32 %v144, %v212
  %v216 = vtanh.pop %v215
  %s217 = scalar_lea.vmem %s44, 8
  %218 = vst [vmem:[%s217] sm:$0xff] %v216
  %s219 = scalar_lea.vmem %s36, 16
  %v220 = vld [vmem:[%s219] sm:$0xff]
  %221 = vmatprep.subr.mxu0 0.0
  %222 = vmatpush1.msra.mxu0 %v52
  %223 = vmatprep.subr.mxu0 0.0
  %224 = vmatpush1.msra.mxu0 %v53
  %225 = vmatprep.subr.mxu0 0.0
  %226 = vmatpush1.msra.mxu0 %v54
  %227 = vmatprep.subr.mxu0 0.0
  %228 = vmatpush1.msra.mxu0 %v55
  %229 = vmatprep.subr.mxu0 0.0
  %230 = vmatpush1.msra.mxu0 %v56
  %231 = vmatprep.subr.mxu0 0.0
  %232 = vmatpush1.msra.mxu0 %v57
  %233 = vmatprep.subr.mxu0 0.0
  %234 = vmatpush1.msra.mxu0 %v58
  %235 = vmatprep.subr.mxu0 0.0
  %236 = vmatpush1.msra.mxu0 %v59
  %237 = vmatprep.subr.mxu0 0.0
  %238 = vmatpush1.msra.mxu0 %v60
  %239 = vmatprep.subr.mxu0 0.0
  %240 = vmatpush1.msra.mxu0 %v61
  %241 = vmatprep.subr.mxu0 0.0
  %242 = vmatpush1.msra.mxu0 %v62
  %243 = vmatprep.subr.mxu0 0.0
  %244 = vmatpush1.msra.mxu0 %v63
  %245 = vmatprep.subr.mxu0 0.0
  %246 = vmatpush1.msra.mxu0 %v64
  %247 = vmatprep.subr.mxu0 0.0
  %248 = vmatpush1.msra.mxu0 %v65
  %249 = vmatprep.subr.mxu0 0.0
  %250 = vmatpush1.msra.mxu0 %v66
  %251 = vmatprep.subr.mxu0 0.0
  %252 = vmatpush1.msra.mxu0 %v67
  %253 = vmatprep.subr.mxu0 0.0
  %254 = vmatpush1.msra.mxu0 0.0
  %255 = vmatprep.subr.mxu0 0.0
  %256 = vmatpush1.msra.mxu0 0.0
  %257 = vmatprep.subr.mxu0 0.0
  %258 = vmatpush1.msra.mxu0 0.0
  %259 = vmatprep.subr.mxu0 0.0
  %260 = vmatpush1.msra.mxu0 0.0
  %261 = vmatprep.subr.mxu0 0.0
  %262 = vmatpush1.msra.mxu0 0.0
  %263 = vmatprep.subr.mxu0 0.0
  %264 = vmatpush1.msra.mxu0 0.0
  %265 = vmatprep.subr.mxu0 0.0
  %266 = vmatpush1.msra.mxu0 0.0
  %267 = vmatprep.subr.mxu0 0.0
  %268 = vmatpush1.msra.mxu0 0.0
  %269 = vmatprep.subr.mxu0 0.0
  %270 = vmatpush1.msra.mxu0 0.0
  %271 = vmatprep.subr.mxu0 0.0
  %272 = vmatpush1.msra.mxu0 0.0
  %273 = vmatprep.subr.mxu0 0.0
  %274 = vmatpush1.msra.mxu0 0.0
  %275 = vmatprep.subr.mxu0 0.0
  %276 = vmatpush1.msra.mxu0 0.0
  %277 = vmatprep.subr.mxu0 0.0
  %278 = vmatpush1.msra.mxu0 0.0
  %279 = vmatprep.subr.mxu0 0.0
  %280 = vmatpush1.msra.mxu0 0.0
  %281 = vmatprep.subr.mxu0 0.0
  %282 = vmatpush1.msra.mxu0 0.0
  %283 = vmatprep.subr.mxu0 0.0
  %284 = vmatpush1.msra.mxu0 0.0
  %285 = vmatprep.mubr.f32.mxu0 0.0
  %286 = vmatmul.mubr.f32.gmra.mrb[0].mxu0 %v216
  %v287 = vpop.f32.mrb[0].mxu0
  %v288 = vadd.f32 0.0, %v287
  %v289 = vpop.f32.mrb[0].mxu0
  %290 = vdwg.mxu0
  %v291 = vadd.f32 %v220, %v288
  %v292 = vtanh.pop %v291
  %s293 = scalar_lea.vmem %s44, 16
  %294 = vst [vmem:[%s293] sm:$0xff] %v292
  %s295 = scalar_lea.vmem %s36, 24
  %v296 = vld [vmem:[%s295] sm:$0xff]
  %297 = vmatprep.subr.mxu0 0.0
  %298 = vmatpush1.msra.mxu0 %v52
  %299 = vmatprep.subr.mxu0 0.0
  %300 = vmatpush1.msra.mxu0 %v53
  %301 = vmatprep.subr.mxu0 0.0
  %302 = vmatpush1.msra.mxu0 %v54
  %303 = vmatprep.subr.mxu0 0.0
  %304 = vmatpush1.msra.mxu0 %v55
  %305 = vmatprep.subr.mxu0 0.0
  %306 = vmatpush1.msra.mxu0 %v56
  %307 = vmatprep.subr.mxu0 0.0
  %308 = vmatpush1.msra.mxu0 %v57
  %309 = vmatprep.subr.mxu0 0.0
  %310 = vmatpush1.msra.mxu0 %v58
  %311 = vmatprep.subr.mxu0 0.0
  %312 = vmatpush1.msra.mxu0 %v59
  %313 = vmatprep.subr.mxu0 0.0
  %314 = vmatpush1.msra.mxu0 %v60
  %315 = vmatprep.subr.mxu0 0.0
  %316 = vmatpush1.msra.mxu0 %v61
  %317 = vmatprep.subr.mxu0 0.0
  %318 = vmatpush1.msra.mxu0 %v62
  %319 = vmatprep.subr.mxu0 0.0
  %320 = vmatpush1.msra.mxu0 %v63
  %321 = vmatprep.subr.mxu0 0.0
  %322 = vmatpush1.msra.mxu0 %v64
  %323 = vmatprep.subr.mxu0 0.0
  %324 = vmatpush1.msra.mxu0 %v65
  %325 = vmatprep.subr.mxu0 0.0
  %326 = vmatpush1.msra.mxu0 %v66
  %327 = vmatprep.subr.mxu0 0.0
  %328 = vmatpush1.msra.mxu0 %v67
  %329 = vmatprep.subr.mxu0 0.0
  %330 = vmatpush1.msra.mxu0 0.0
  %331 = vmatprep.subr.mxu0 0.0
  %332 = vmatpush1.msra.mxu0 0.0
  %333 = vmatprep.subr.mxu0 0.0
  %334 = vmatpush1.msra.mxu0 0.0
  %335 = vmatprep.subr.mxu0 0.0
  %336 = vmatpush1.msra.mxu0 0.0
  %337 = vmatprep.subr.mxu0 0.0
  %338 = vmatpush1.msra.mxu0 0.0
  %339 = vmatprep.subr.mxu0 0.0
  %340 = vmatpush1.msra.mxu0 0.0
  %341 = vmatprep.subr.mxu0 0.0
  %342 = vmatpush1.msra.mxu0 0.0
  %343 = vmatprep.subr.mxu0 0.0
  %344 = vmatpush1.msra.mxu0 0.0
  %345 = vmatprep.subr.mxu0 0.0
  %346 = vmatpush1.msra.mxu0 0.0
  %347 = vmatprep.subr.mxu0 0.0
  %348 = vmatpush1.msra.mxu0 0.0
  %349 = vmatprep.subr.mxu0 0.0
  %350 = vmatpush1.msra.mxu0 0.0
  %351 = vmatprep.subr.mxu0 0.0
  %352 = vmatpush1.msra.mxu0 0.0
  %353 = vmatprep.subr.mxu0 0.0
  %354 = vmatpush1.msra.mxu0 0.0
  %355 = vmatprep.subr.mxu0 0.0
  %356 = vmatpush1.msra.mxu0 0.0
  %357 = vmatprep.subr.mxu0 0.0
  %358 = vmatpush1.msra.mxu0 0.0
  %359 = vmatprep.subr.mxu0 0.0
  %360 = vmatpush1.msra.mxu0 0.0
  %361 = vmatprep.mubr.f32.mxu0 0.0
  %362 = vmatmul.mubr.f32.gmra.mrb[0].mxu0 %v292
  %v363 = vpop.f32.mrb[0].mxu0
  %v364 = vadd.f32 0.0, %v363
  %v365 = vpop.f32.mrb[0].mxu0
  %366 = vdwg.mxu0
  %v367 = vadd.f32 %v296, %v364
  %v368 = vtanh.pop %v367
  %s369 = scalar_lea.vmem %s44, 24
  %370 = vst [vmem:[%s369] sm:$0xff] %v368
  %s371 = scalar_lea.vmem %s36, 32
  %v372 = vld [vmem:[%s371] sm:$0xff]
  %373 = vmatprep.subr.mxu0 0.0
  %374 = vmatpush1.msra.mxu0 %v52
  %375 = vmatprep.subr.mxu0 0.0
  %376 = vmatpush1.msra.mxu0 %v53
  %377 = vmatprep.subr.mxu0 0.0
  %378 = vmatpush1.msra.mxu0 %v54
  %379 = vmatprep.subr.mxu0 0.0
  %380 = vmatpush1.msra.mxu0 %v55
  %381 = vmatprep.subr.mxu0 0.0
  %382 = vmatpush1.msra.mxu0 %v56
  %383 = vmatprep.subr.mxu0 0.0
  %384 = vmatpush1.msra.mxu0 %v57
  %385 = vmatprep.subr.mxu0 0.0
  %386 = vmatpush1.msra.mxu0 %v58
  %387 = vmatprep.subr.mxu0 0.0
  %388 = vmatpush1.msra.mxu0 %v59
  %389 = vmatprep.subr.mxu0 0.0
  %390 = vmatpush1.msra.mxu0 %v60
  %391 = vmatprep.subr.mxu0 0.0
  %392 = vmatpush1.msra.mxu0 %v61
  %393 = vmatprep.subr.mxu0 0.0
  %394 = vmatpush1.msra.mxu0 %v62
  %395 = vmatprep.subr.mxu0 0.0
  %396 = vmatpush1.msra.mxu0 %v63
  %397 = vmatprep.subr.mxu0 0.0
  %398 = vmatpush1.msra.mxu0 %v64
  %399 = vmatprep.subr.mxu0 0.0
  %400 = vmatpush1.msra.mxu0 %v65
  %401 = vmatprep.subr.mxu0 0.0
  %402 = vmatpush1.msra.mxu0 %v66
  %403 = vmatprep.subr.mxu0 0.0
  %404 = vmatpush1.msra.mxu0 %v67
  %405 = vmatprep.subr.mxu0 0.0
  %406 = vmatpush1.msra.mxu0 0.0
  %407 = vmatprep.subr.mxu0 0.0
  %408 = vmatpush1.msra.mxu0 0.0
  %409 = vmatprep.subr.mxu0 0.0
  %410 = vmatpush1.msra.mxu0 0.0
  %411 = vmatprep.subr.mxu0 0.0
  %412 = vmatpush1.msra.mxu0 0.0
  %413 = vmatprep.subr.mxu0 0.0
  %414 = vmatpush1.msra.mxu0 0.0
  %415 = vmatprep.subr.mxu0 0.0
  %416 = vmatpush1.msra.mxu0 0.0
  %417 = vmatprep.subr.mxu0 0.0
  %418 = vmatpush1.msra.mxu0 0.0
  %419 = vmatprep.subr.mxu0 0.0
  %420 = vmatpush1.msra.mxu0 0.0
  %421 = vmatprep.subr.mxu0 0.0
  %422 = vmatpush1.msra.mxu0 0.0
  %423 = vmatprep.subr.mxu0 0.0
  %424 = vmatpush1.msra.mxu0 0.0
  %425 = vmatprep.subr.mxu0 0.0
  %426 = vmatpush1.msra.mxu0 0.0
  %427 = vmatprep.subr.mxu0 0.0
  %428 = vmatpush1.msra.mxu0 0.0
  %429 = vmatprep.subr.mxu0 0.0
  %430 = vmatpush1.msra.mxu0 0.0
  %431 = vmatprep.subr.mxu0 0.0
  %432 = vmatpush1.msra.mxu0 0.0
  %433 = vmatprep.subr.mxu0 0.0
  %434 = vmatpush1.msra.mxu0 0.0
  %435 = vmatprep.subr.mxu0 0.0
  %436 = vmatpush1.msra.mxu0 0.0
  %437 = vmatprep.mubr.f32.mxu0 0.0
  %438 = vmatmul.mubr.f32.gmra.mrb[0].mxu0 %v368
  %v439 = vpop.f32.mrb[0].mxu0
  %v440 = vadd.f32 0.0, %v439
  %v441 = vpop.f32.mrb[0].mxu0
  %442 = vdwg.mxu0
  %v443 = vadd.f32 %v372, %v440
  %v444 = vtanh.pop %v443
  %s445 = scalar_lea.vmem %s44, 32
  %446 = vst [vmem:[%s445] sm:$0xff] %v444
  %s447 = scalar_lea.vmem %s36, 40
  %v448 = vld [vmem:[%s447] sm:$0xff]
  %449 = vmatprep.subr.mxu0 0.0
  %450 = vmatpush1.msra.mxu0 %v52
  %451 = vmatprep.subr.mxu0 0.0
  %452 = vmatpush1.msra.mxu0 %v53
  %453 = vmatprep.subr.mxu0 0.0
  %454 = vmatpush1.msra.mxu0 %v54
  %455 = vmatprep.subr.mxu0 0.0
  %456 = vmatpush1.msra.mxu0 %v55
  %457 = vmatprep.subr.mxu0 0.0
  %458 = vmatpush1.msra.mxu0 %v56
  %459 = vmatprep.subr.mxu0 0.0
  %460 = vmatpush1.msra.mxu0 %v57
  %461 = vmatprep.subr.mxu0 0.0
  %462 = vmatpush1.msra.mxu0 %v58
  %463 = vmatprep.subr.mxu0 0.0
  %464 = vmatpush1.msra.mxu0 %v59
  %465 = vmatprep.subr.mxu0 0.0
  %466 = vmatpush1.msra.mxu0 %v60
  %467 = vmatprep.subr.mxu0 0.0
  %468 = vmatpush1.msra.mxu0 %v61
  %469 = vmatprep.subr.mxu0 0.0
  %470 = vmatpush1.msra.mxu0 %v62
  %471 = vmatprep.subr.mxu0 0.0
  %472 = vmatpush1.msra.mxu0 %v63
  %473 = vmatprep.subr.mxu0 0.0
  %474 = vmatpush1.msra.mxu0 %v64
  %475 = vmatprep.subr.mxu0 0.0
  %476 = vmatpush1.msra.mxu0 %v65
  %477 = vmatprep.subr.mxu0 0.0
  %478 = vmatpush1.msra.mxu0 %v66
  %479 = vmatprep.subr.mxu0 0.0
  %480 = vmatpush1.msra.mxu0 %v67
  %481 = vmatprep.subr.mxu0 0.0
  %482 = vmatpush1.msra.mxu0 0.0
  %483 = vmatprep.subr.mxu0 0.0
  %484 = vmatpush1.msra.mxu0 0.0
  %485 = vmatprep.subr.mxu0 0.0
  %486 = vmatpush1.msra.mxu0 0.0
  %487 = vmatprep.subr.mxu0 0.0
  %488 = vmatpush1.msra.mxu0 0.0
  %489 = vmatprep.subr.mxu0 0.0
  %490 = vmatpush1.msra.mxu0 0.0
  %491 = vmatprep.subr.mxu0 0.0
  %492 = vmatpush1.msra.mxu0 0.0
  %493 = vmatprep.subr.mxu0 0.0
  %494 = vmatpush1.msra.mxu0 0.0
  %495 = vmatprep.subr.mxu0 0.0
  %496 = vmatpush1.msra.mxu0 0.0
  %497 = vmatprep.subr.mxu0 0.0
  %498 = vmatpush1.msra.mxu0 0.0
  %499 = vmatprep.subr.mxu0 0.0
  %500 = vmatpush1.msra.mxu0 0.0
  %501 = vmatprep.subr.mxu0 0.0
  %502 = vmatpush1.msra.mxu0 0.0
  %503 = vmatprep.subr.mxu0 0.0
  %504 = vmatpush1.msra.mxu0 0.0
  %505 = vmatprep.subr.mxu0 0.0
  %506 = vmatpush1.msra.mxu0 0.0
  %507 = vmatprep.subr.mxu0 0.0
  %508 = vmatpush1.msra.mxu0 0.0
  %509 = vmatprep.subr.mxu0 0.0
  %510 = vmatpush1.msra.mxu0 0.0
  %511 = vmatprep.subr.mxu0 0.0
  %512 = vmatpush1.msra.mxu0 0.0
  %513 = vmatprep.mubr.f32.mxu0 0.0
  %514 = vmatmul.mubr.f32.gmra.mrb[0].mxu0 %v444
  %v515 = vpop.f32.mrb[0].mxu0
  %v516 = vadd.f32 0.0, %v515
  %v517 = vpop.f32.mrb[0].mxu0
  %518 = vdwg.mxu0
  %v519 = vadd.f32 %v448, %v516
  %v520 = vtanh.pop %v519
  %s521 = scalar_lea.vmem %s44, 40
  %522 = vst [vmem:[%s521] sm:$0xff] %v520
  %s523 = scalar_lea.vmem %s36, 48
  %v524 = vld [vmem:[%s523] sm:$0xff]
  %525 = vmatprep.subr.mxu0 0.0
  %526 = vmatpush1.msra.mxu0 %v52
  %527 = vmatprep.subr.mxu0 0.0
  %528 = vmatpush1.msra.mxu0 %v53
  %529 = vmatprep.subr.mxu0 0.0
  %530 = vmatpush1.msra.mxu0 %v54
  %531 = vmatprep.subr.mxu0 0.0
  %532 = vmatpush1.msra.mxu0 %v55
  %533 = vmatprep.subr.mxu0 0.0
  %534 = vmatpush1.msra.mxu0 %v56
  %535 = vmatprep.subr.mxu0 0.0
  %536 = vmatpush1.msra.mxu0 %v57
  %537 = vmatprep.subr.mxu0 0.0
  %538 = vmatpush1.msra.mxu0 %v58
  %539 = vmatprep.subr.mxu0 0.0
  %540 = vmatpush1.msra.mxu0 %v59
  %541 = vmatprep.subr.mxu0 0.0
  %542 = vmatpush1.msra.mxu0 %v60
  %543 = vmatprep.subr.mxu0 0.0
  %544 = vmatpush1.msra.mxu0 %v61
  %545 = vmatprep.subr.mxu0 0.0
  %546 = vmatpush1.msra.mxu0 %v62
  %547 = vmatprep.subr.mxu0 0.0
  %548 = vmatpush1.msra.mxu0 %v63
  %549 = vmatprep.subr.mxu0 0.0
  %550 = vmatpush1.msra.mxu0 %v64
  %551 = vmatprep.subr.mxu0 0.0
  %552 = vmatpush1.msra.mxu0 %v65
  %553 = vmatprep.subr.mxu0 0.0
  %554 = vmatpush1.msra.mxu0 %v66
  %555 = vmatprep.subr.mxu0 0.0
  %556 = vmatpush1.msra.mxu0 %v67
  %557 = vmatprep.subr.mxu0 0.0
  %558 = vmatpush1.msra.mxu0 0.0
  %559 = vmatprep.subr.mxu0 0.0
  %560 = vmatpush1.msra.mxu0 0.0
  %561 = vmatprep.subr.mxu0 0.0
  %562 = vmatpush1.msra.mxu0 0.0
  %563 = vmatprep.subr.mxu0 0.0
  %564 = vmatpush1.msra.mxu0 0.0
  %565 = vmatprep.subr.mxu0 0.0
  %566 = vmatpush1.msra.mxu0 0.0
  %567 = vmatprep.subr.mxu0 0.0
  %568 = vmatpush1.msra.mxu0 0.0
  %569 = vmatprep.subr.mxu0 0.0
  %570 = vmatpush1.msra.mxu0 0.0
  %571 = vmatprep.subr.mxu0 0.0
  %572 = vmatpush1.msra.mxu0 0.0
  %573 = vmatprep.subr.mxu0 0.0
  %574 = vmatpush1.msra.mxu0 0.0
  %575 = vmatprep.subr.mxu0 0.0
  %576 = vmatpush1.msra.mxu0 0.0
  %577 = vmatprep.subr.mxu0 0.0
  %578 = vmatpush1.msra.mxu0 0.0
  %579 = vmatprep.subr.mxu0 0.0
  %580 = vmatpush1.msra.mxu0 0.0
  %581 = vmatprep.subr.mxu0 0.0
  %582 = vmatpush1.msra.mxu0 0.0
  %583 = vmatprep.subr.mxu0 0.0
  %584 = vmatpush1.msra.mxu0 0.0
  %585 = vmatprep.subr.mxu0 0.0
  %586 = vmatpush1.msra.mxu0 0.0
  %587 = vmatprep.subr.mxu0 0.0
  %588 = vmatpush1.msra.mxu0 0.0
  %589 = vmatprep.mubr.f32.mxu0 0.0
  %590 = vmatmul.mubr.f32.gmra.mrb[0].mxu0 %v520
  %v591 = vpop.f32.mrb[0].mxu0
  %v592 = vadd.f32 0.0, %v591
  %v593 = vpop.f32.mrb[0].mxu0
  %594 = vdwg.mxu0
  %v595 = vadd.f32 %v524, %v592
  %v596 = vtanh.pop %v595
  %s597 = scalar_lea.vmem %s44, 48
  %598 = vst [vmem:[%s597] sm:$0xff] %v596
  %s599 = scalar_lea.vmem %s36, 56
  %v600 = vld [vmem:[%s599] sm:$0xff]
  %601 = vmatprep.subr.mxu0 0.0
  %602 = vmatpush1.msra.mxu0 %v52
  %603 = vmatprep.subr.mxu0 0.0
  %604 = vmatpush1.msra.mxu0 %v53
  %605 = vmatprep.subr.mxu0 0.0
  %606 = vmatpush1.msra.mxu0 %v54
  %607 = vmatprep.subr.mxu0 0.0
  %608 = vmatpush1.msra.mxu0 %v55
  %609 = vmatprep.subr.mxu0 0.0
  %610 = vmatpush1.msra.mxu0 %v56
  %611 = vmatprep.subr.mxu0 0.0
  %612 = vmatpush1.msra.mxu0 %v57
  %613 = vmatprep.subr.mxu0 0.0
  %614 = vmatpush1.msra.mxu0 %v58
  %615 = vmatprep.subr.mxu0 0.0
  %616 = vmatpush1.msra.mxu0 %v59
  %617 = vmatprep.subr.mxu0 0.0
  %618 = vmatpush1.msra.mxu0 %v60
  %619 = vmatprep.subr.mxu0 0.0
  %620 = vmatpush1.msra.mxu0 %v61
  %621 = vmatprep.subr.mxu0 0.0
  %622 = vmatpush1.msra.mxu0 %v62
  %623 = vmatprep.subr.mxu0 0.0
  %624 = vmatpush1.msra.mxu0 %v63
  %625 = vmatprep.subr.mxu0 0.0
  %626 = vmatpush1.msra.mxu0 %v64
  %627 = vmatprep.subr.mxu0 0.0
  %628 = vmatpush1.msra.mxu0 %v65
  %629 = vmatprep.subr.mxu0 0.0
  %630 = vmatpush1.msra.mxu0 %v66
  %631 = vmatprep.subr.mxu0 0.0
  %632 = vmatpush1.msra.mxu0 %v67
  %633 = vmatprep.subr.mxu0 0.0
  %634 = vmatpush1.msra.mxu0 0.0
  %635 = vmatprep.subr.mxu0 0.0
  %636 = vmatpush1.msra.mxu0 0.0
  %637 = vmatprep.subr.mxu0 0.0
  %638 = vmatpush1.msra.mxu0 0.0
  %639 = vmatprep.subr.mxu0 0.0
  %640 = vmatpush1.msra.mxu0 0.0
  %641 = vmatprep.subr.mxu0 0.0
  %642 = vmatpush1.msra.mxu0 0.0
  %643 = vmatprep.subr.mxu0 0.0
  %644 = vmatpush1.msra.mxu0 0.0
  %645 = vmatprep.subr.mxu0 0.0
  %646 = vmatpush1.msra.mxu0 0.0
  %647 = vmatprep.subr.mxu0 0.0
  %648 = vmatpush1.msra.mxu0 0.0
  %649 = vmatprep.subr.mxu0 0.0
  %650 = vmatpush1.msra.mxu0 0.0
  %651 = vmatprep.subr.mxu0 0.0
  %652 = vmatpush1.msra.mxu0 0.0
  %653 = vmatprep.subr.mxu0 0.0
  %654 = vmatpush1.msra.mxu0 0.0
  %655 = vmatprep.subr.mxu0 0.0
  %656 = vmatpush1.msra.mxu0 0.0
  %657 = vmatprep.subr.mxu0 0.0
  %658 = vmatpush1.msra.mxu0 0.0
  %659 = vmatprep.subr.mxu0 0.0
  %660 = vmatpush1.msra.mxu0 0.0
  %661 = vmatprep.subr.mxu0 0.0
  %662 = vmatpush1.msra.mxu0 0.0
  %663 = vmatprep.subr.mxu0 0.0
  %664 = vmatpush1.msra.mxu0 0.0
  %665 = vmatprep.mubr.f32.mxu0 0.0
  %666 = vmatmul.mubr.f32.gmra.mrb[0].mxu0 %v596
  %v667 = vpop.f32.mrb[0].mxu0
  %v668 = vadd.f32 0.0, %v667
  %v669 = vpop.f32.mrb[0].mxu0
  %670 = vdwg.mxu0
  %v671 = vadd.f32 %v600, %v668
  %v672 = vtanh.pop %v671
  %s673 = scalar_lea.vmem %s44, 56
  %674 = vst [vmem:[%s673] sm:$0xff] %v672
  %675 = vst [vmem:[#allocation2] sm:$0xff] %v672
  %s676 = sadd.s32 0, 0
  %s677 = smul.u32 8, %s676
  %p678 = scmp.lt.s32.totalorder %s677, 7
  %s679 = scalar_select %p678, %s677, 7
  %s680 = smul.addr %s679, 8
  %s681 = scalar_lea.vmem %s2, %s680
  // Predicated region
  $region14: #{rnn_forward.1} parent=0 // pred_check
    _
  $region15: #{rnn_forward.1} parent=0 // pred_check_branch
    %683 = sbr.rel (0) target = $region17
  $region16: #{rnn_forward.1} parent=0 // pred_region
    %s684 = sadd.s32 0, 0
    %s685 = smul.u32 8, %s684
  $region17: #{rnn_forward.1} parent=0 // pred_fallthru
    _
  // Predicated region
  $region18: #{rnn_forward.1} parent=0 // pred_check
    _
  $region19: #{rnn_forward.1} parent=0 // pred_check_branch
    %687 = sbr.rel (0) target = $region21
  $region20: #{rnn_forward.1} parent=0 // pred_region
    %s688 = sadd.s32 0, 0
    %s689 = smul.u32 8, %s688
    %p690 = scmp.lt.s32.totalorder %s689, 7
    %s691 = scalar_select %p690, %s689, 7
    %s692 = smul.addr %s691, 8
    %s693 = scalar_lea.vmem %s2, %s692
  $region21: #{rnn_forward.1} parent=0 // pred_fallthru
    _

</llo_original>
